<compile_context>
chip_gen: v6e
topology: v6e:2x2x1
jax: 0.10.0
libtpu: 0.0.40
codegen_flags: <defaults>
</compile_context>

<pallas_src>
import functools

import jax
import jax.numpy as jnp
from jax.experimental import pallas as pl
from jax.experimental.pallas import tpu as pltpu


def _round_up(v, m):
    return ((v + m - 1) // m) * m


def _vmem_capacity_bytes():
    """Physical VMEM capacity of the local TPU; conservative fallback."""
    try:
        return int(pltpu.get_tpu_info().vmem_capacity_bytes)
    except Exception:
        return 64 * 1024 * 1024  # v7x-sized fallback: safe on every generation


def _graph_conv_body(adj_ref, xw_ref, bias_ref, o_ref, acc_ref, *,
                     n, tm, tk, add_self, normalize_embedding, compute_dtype):
    """One (graph b, row-tile r, k-tile k) step.

    adj_ref : (tm, tk)  original adj dtype (batch dim squeezed)
    xw_ref  : (tk, Dp)  compute dtype (x @ W, zero-padded rows/cols)
    bias_ref: (1, Dp)   float32, or None when the layer has no bias
    o_ref   : (tm, Dp)  out dtype (written only on the last k step)
    acc_ref : (tm, Dp)  float32 accumulator scratch
    """
    r = pl.program_id(1)
    k = pl.program_id(2)

    @pl.when(k == 0)
    def _():
        acc_ref[...] = jnp.zeros_like(acc_ref)

    a = adj_ref[...]
    if n % tk != 0:
        # Ragged last K tile: zero out adjacency columns >= n (they would be
        # undefined out-of-bounds data); xw rows >= n are zero-padded too, so
        # the padded region contributes exactly 0 to the accumulator.
        col = jax.lax.broadcasted_iota(jnp.int32, a.shape, 1)
        a = jnp.where(col < (n - k * tk), a, jnp.zeros_like(a))
    a = a.astype(compute_dtype)

    if add_self:
        # (adj @ x + x) @ W == (adj + I) @ (x @ W): fold the self loop into
        # the adjacency tile (only the diagonal-crossing tiles get 1s).
        row_g = jax.lax.broadcasted_iota(jnp.int32, a.shape, 0) + r * tm
        col_g = jax.lax.broadcasted_iota(jnp.int32, a.shape, 1) + k * tk
        a = a + (row_g == col_g).astype(compute_dtype)

    acc_ref[...] += jnp.dot(a, xw_ref[...], preferred_element_type=jnp.float32)

    @pl.when(k == pl.num_programs(2) - 1)
    def _():
        y = acc_ref[...]
        if bias_ref is not None:
            y = y + bias_ref[...]          # (1, Dp) broadcasts over rows
        if normalize_embedding:
            # F.normalize(y, p=2, dim=2): padded columns are exactly zero so
            # they do not perturb the norm.
            sumsq = jnp.sum(y * y, axis=-1, keepdims=True)
            y = y * jax.lax.rsqrt(jnp.maximum(sumsq, 1e-24))
        o_ref[...] = y.astype(o_ref.dtype)


def graph_conv(x, adj, weight, bias=None, *,
               add_self=False, normalize_embedding=False,
               block_rows=None, block_k=None,
               compute_dtype=jnp.bfloat16, out_dtype=None,
               vmem_limit_bytes=None):
    """Pallas TPU implementation of GraphConv.forward (inference path).

    x      : (B, N, Din) node features
    adj    : (B, N, N)   adjacency (any float dtype; used as-is, no pre-pass)
    weight : (Din, Dout)
    bias   : (Dout,) or None
    """
    B, N, Din = x.shape
    Dout = weight.shape[1]
    assert adj.shape == (B, N, N)
    assert weight.shape == (Din, Dout)
    use_bias = bias is not None
    out_dtype = x.dtype if out_dtype is None else out_dtype

    # ---- Generation-aware budgets / tile sizes -----------------------------
    vmem_cap = _vmem_capacity_bytes()
    if vmem_limit_bytes is None:
        vmem_limit_bytes = int(0.6 * vmem_cap)
    if block_rows is None:
        # 512-row tiles on 128-MiB-VMEM parts (v5e/v6e); 256 on v7x (64 MiB).
        block_rows = 512 if vmem_cap >= 100 * 1024 * 1024 else 256
    if block_k is None:
        block_k = 1024

    tm = block_rows if block_rows < N else N     # multiple of 8 or == N
    tk = block_k if block_k < N else N           # multiple of 128 or == N
    num_r = pl.cdiv(N, tm)
    num_k = pl.cdiv(N, tk)
    Nk = num_k * tk                              # padded contraction length
    Dp = _round_up(Dout, 128)                    # lane-dense output width

    # ---- Hoisted projection xw = x @ W (small: O(N * Dp)) ------------------
    xw = jnp.matmul(x.astype(jnp.float32), weight.astype(jnp.float32))
    xw_p = jnp.zeros((B, Nk, Dp), compute_dtype)
    xw_p = xw_p.at[:, :N, :Dout].set(xw.astype(compute_dtype))

    inputs = [adj, xw_p]
    in_specs = [
        # adjacency tile straight from HBM (original dtype, no wrapper copy)
        pl.BlockSpec((None, tm, tk), lambda b, r, k: (b, r, k)),
        # projected features: new K tile per k step
        pl.BlockSpec((None, tk, Dp), lambda b, r, k: (b, k, 0)),
    ]
    if use_bias:
        bias_p = jnp.zeros((1, Dp), jnp.float32)
        bias_p = bias_p.at[0, :Dout].set(bias.reshape(-1).astype(jnp.float32))
        inputs.append(bias_p)
        in_specs.append(pl.BlockSpec((1, Dp), lambda b, r, k: (0, 0)))

    body = functools.partial(
        _graph_conv_body, n=N, tm=tm, tk=tk, add_self=add_self,
        normalize_embedding=normalize_embedding, compute_dtype=compute_dtype)

    if use_bias:
        def kernel(adj_ref, xw_ref, bias_ref, o_ref, acc_ref):
            body(adj_ref, xw_ref, bias_ref, o_ref, acc_ref)
    else:
        def kernel(adj_ref, xw_ref, o_ref, acc_ref):
            body(adj_ref, xw_ref, None, o_ref, acc_ref)

    out = pl.pallas_call(
        kernel,
        out_shape=jax.ShapeDtypeStruct((B, N, Dp), out_dtype),
        grid_spec=pltpu.PrefetchScalarGridSpec(
            num_scalar_prefetch=0,
            grid=(B, num_r, num_k),
            in_specs=in_specs,
            out_specs=pl.BlockSpec((None, tm, Dp), lambda b, r, k: (b, r, 0)),
            scratch_shapes=[pltpu.VMEM((tm, Dp), jnp.float32)],
        ),
        compiler_params=pltpu.CompilerParams(
            dimension_semantics=("parallel", "parallel", "arbitrary"),
            vmem_limit_bytes=vmem_limit_bytes,
        ),
    )(*inputs)

    # Strip lane padding.  Consumers that can read the padded (N, Dp) slab
    # directly should do so to avoid this extra pass over the output.
    return out[:, :, :Dout]


def graph_conv_ref(x, adj, weight, bias=None, *,
                   add_self=False, normalize_embedding=False):
    """Pure-JAX reference mirroring the PyTorch module (f32)."""
    y = jnp.matmul(adj, x)
    if add_self:
        y = y + x
    y = jnp.matmul(y, weight)
    if bias is not None:
        y = y + bias
    if normalize_embedding:
        norm = jnp.sqrt(jnp.sum(y * y, axis=2, keepdims=True))
        y = y / jnp.maximum(norm, 1e-12)
    return y


if __name__ == "__main__":
    key = jax.random.PRNGKey(0)
    kx, kadj, kw, kb = jax.random.split(key, 4)

    # ---- Test 1: small graph, full-featured path (bf16 compute) ------------
    B, N, Din, Dout = 2, 16, 32, 24
    x = jax.random.normal(kx, (B, N, Din), jnp.float32)
    adj = jax.random.uniform(kadj, (B, N, N), jnp.float32)
    weight = jax.random.normal(kw, (Din, Dout), jnp.float32) * 0.1
    bias = jax.random.normal(kb, (Dout,), jnp.float32) * 0.1

    out = graph_conv(x, adj, weight, bias,
                     add_self=True, normalize_embedding=True)
    out = jax.block_until_ready(out)
    ref = graph_conv_ref(x, adj, weight, bias,
                         add_self=True, normalize_embedding=True)
    assert out.shape == (B, N, Dout)
    assert jnp.allclose(out, ref, atol=3e-2, rtol=3e-2), (
        float(jnp.max(jnp.abs(out - ref))))

    # ---- Test 2: simplified path y = W(Ax) ----------------------------------
    out2 = graph_conv(x, adj, weight, None)
    out2 = jax.block_until_ready(out2)
    ref2 = graph_conv_ref(x, adj, weight, None)
    assert out2.shape == (B, N, Dout)
    scale = jnp.maximum(jnp.max(jnp.abs(ref2)), 1.0)
    assert jnp.allclose(out2 / scale, ref2 / scale, atol=3e-2, rtol=3e-2), (
        float(jnp.max(jnp.abs(out2 - ref2))))

    # ---- Test 3: ragged tiles + K-grid (f32 compute, checks tiling/masking) -
    B3, N3, Din3, Dout3 = 1, 200, 16, 8
    k3 = jax.random.split(key, 8)
    x3 = jax.random.normal(k3[4], (B3, N3, Din3), jnp.float32)
    adj3 = jax.random.uniform(k3[5], (B3, N3, N3), jnp.float32)
    w3 = jax.random.normal(k3[6], (Din3, Dout3), jnp.float32) * 0.1
    b3 = jax.random.normal(k3[7], (Dout3,), jnp.float32) * 0.1

    out3 = graph_conv(x3, adj3, w3, b3,
                      add_self=True, normalize_embedding=True,
                      block_rows=128, block_k=128,
                      compute_dtype=jnp.float32)
    out3 = jax.block_until_ready(out3)
    ref3 = graph_conv_ref(x3, adj3, w3, b3,
                          add_self=True, normalize_embedding=True)
    assert out3.shape == (B3, N3, Dout3)
    assert jnp.allclose(out3, ref3, atol=1e-4, rtol=1e-4), (
        float(jnp.max(jnp.abs(out3 - ref3))))

    print("KERNEL_OK")
</pallas_src>

<mosaic_0001>
module attributes {stable_mosaic.version = 11 : i64} {
  func.func @kernel(%arg0: i32, %arg1: i32, %arg2: i32, %arg3: memref<1x16x16xf32, #tpu.memory_space<vmem>>, %arg4: memref<1x16x128xbf16, #tpu.memory_space<vmem>>, %arg5: memref<1x128xf32, #tpu.memory_space<vmem>>, %arg6: memref<1x16x128xf32, #tpu.memory_space<vmem>>, %arg7: memref<16x128xf32, #tpu.memory_space<vmem>>) attributes {dimension_semantics = [#tpu.dimension_semantics<parallel>, #tpu.dimension_semantics<parallel>, #tpu.dimension_semantics<arbitrary>], iteration_bounds = array<i64: 2, 1, 1>, scalar_prefetch = 0 : i64, scratch_operands = 1 : i64, tpu.core_type = #tpu.core_type<tc>, window_params = [{transform_indices = @transform_0, window_bounds = array<i64: 1, 16, 16>}, {transform_indices = @transform_1, window_bounds = array<i64: 1, 16, 128>}, {pipeline_mode = #tpu.pipeline_mode<synchronous>, transform_indices = @transform_2, window_bounds = array<i64: 1, 128>}, {transform_indices = @transform_3, window_bounds = array<i64: 1, 16, 128>}]} {
    %c0_i32 = arith.constant 0 : i32
    %0 = arith.cmpi eq, %arg2, %c0_i32 : i32
    %1 = arith.extui %0 : i1 to i32
    %c0_i32_0 = arith.constant 0 : i32
    %2 = arith.cmpi ne, %1, %c0_i32_0 : i32
    scf.if %2 {
      %cst_13 = arith.constant 0.000000e+00 : f32
      %28 = vector.broadcast %cst_13 : f32 to vector<16x128xf32>
      %c0_14 = arith.constant 0 : index
      %c0_15 = arith.constant 0 : index
      %29 = vector.load %arg7[%c0_14, %c0_15] : memref<16x128xf32, #tpu.memory_space<vmem>>, vector<16x128xf32>
      tpu.vector_store %arg7[%c0_14, %c0_15], %28 {strides = array<i32>} : memref<16x128xf32, #tpu.memory_space<vmem>>, vector<16x128xf32>,
    } else {
    }
    %c0 = arith.constant 0 : index
    %c0_1 = arith.constant 0 : index
    %c0_2 = arith.constant 0 : index
    %3 = vector.load %arg3[%c0, %c0_1, %c0_2] : memref<1x16x16xf32, #tpu.memory_space<vmem>>, vector<1x16x16xf32>
    %4 = vector.shape_cast %3 : vector<1x16x16xf32> to vector<16x16xf32>
    %5 = arith.truncf %4 : vector<16x16xf32> to vector<16x16xbf16>
    %6 = tpu.iota {dimensions = array<i32: 0>} : vector<16x16xi32>
    %c16_i32 = arith.constant 16 : i32
    %7 = arith.muli %arg1, %c16_i32 : i32
    %8 = vector.broadcast %7 : i32 to vector<16x16xi32>
    %9 = arith.addi %6, %8 : vector<16x16xi32>
    %10 = tpu.iota {dimensions = array<i32: 1>} : vector<16x16xi32>
    %c16_i32_3 = arith.constant 16 : i32
    %11 = arith.muli %arg2, %c16_i32_3 : i32
    %12 = vector.broadcast %11 : i32 to vector<16x16xi32>
    %13 = arith.addi %10, %12 : vector<16x16xi32>
    %14 = arith.cmpi eq, %9, %13 : vector<16x16xi32>
    %15 = arith.extui %14 : vector<16x16xi1> to vector<16x16xi32>
    %16 = arith.sitofp %15 : vector<16x16xi32> to vector<16x16xf32>
    %17 = arith.truncf %16 : vector<16x16xf32> to vector<16x16xbf16>
    %18 = arith.addf %5, %17 : vector<16x16xbf16>
    %c0_4 = arith.constant 0 : index
    %c0_5 = arith.constant 0 : index
    %19 = vector.load %arg7[%c0_4, %c0_5] : memref<16x128xf32, #tpu.memory_space<vmem>>, vector<16x128xf32>
    %c0_6 = arith.constant 0 : index
    %c0_7 = arith.constant 0 : index
    %c0_8 = arith.constant 0 : index
    %20 = vector.load %arg4[%c0_6, %c0_7, %c0_8] : memref<1x16x128xbf16, #tpu.memory_space<vmem>>, vector<1x16x128xbf16>
    %21 = vector.shape_cast %20 : vector<1x16x128xbf16> to vector<16x128xbf16>
    %cst = arith.constant dense<0.000000e+00> : vector<16x128xf32>
    %22 = tpu.matmul %18, %21, %cst {dimension_numbers = #tpu.dot_dimension_numbers<[1], [0], [0], [1], [0, 0, 1, 1], [], []>} : vector<16x16xbf16>, vector<16x128xbf16>, vector<16x128xf32> -> vector<16x128xf32>
    %23 = arith.addf %19, %22 : vector<16x128xf32>
    %c0_9 = arith.constant 0 : index
    %c0_10 = arith.constant 0 : index
    %24 = vector.load %arg7[%c0_9, %c0_10] : memref<16x128xf32, #tpu.memory_space<vmem>>, vector<16x128xf32>
    tpu.vector_store %arg7[%c0_9, %c0_10], %23 {strides = array<i32>} : memref<16x128xf32, #tpu.memory_space<vmem>>, vector<16x128xf32>,
    %c0_i32_11 = arith.constant 0 : i32
    %25 = arith.cmpi eq, %arg2, %c0_i32_11 : i32
    %26 = arith.extui %25 : i1 to i32
    %c0_i32_12 = arith.constant 0 : i32
    %27 = arith.cmpi ne, %26, %c0_i32_12 : i32
    scf.if %27 {
      %c0_13 = arith.constant 0 : index
      %c0_14 = arith.constant 0 : index
      %28 = vector.load %arg7[%c0_13, %c0_14] : memref<16x128xf32, #tpu.memory_space<vmem>>, vector<16x128xf32>
      %c0_15 = arith.constant 0 : index
      %c0_16 = arith.constant 0 : index
      %29 = vector.load %arg5[%c0_15, %c0_16] : memref<1x128xf32, #tpu.memory_space<vmem>>, vector<1x128xf32>
      %30 = vector.broadcast %29 : vector<1x128xf32> to vector<16x128xf32>
      %31 = arith.addf %28, %30 : vector<16x128xf32>
      %32 = arith.mulf %31, %31 : vector<16x128xf32>
      %cst_17 = arith.constant dense<0.000000e+00> : vector<16xf32>
      %33 = vector.multi_reduction <add>, %32, %cst_17 [1] : vector<16x128xf32> to vector<16xf32>
      %34 = vector.shape_cast %33 : vector<16xf32> to vector<16x1xf32>
      %cst_18 = arith.constant 1.000000e-24 : f32
      %35 = vector.broadcast %cst_18 : f32 to vector<16x1xf32>
      %36 = arith.maximumf %34, %35 : vector<16x1xf32>
      %37 = math.rsqrt %36 : vector<16x1xf32>
      %38 = vector.broadcast %37 : vector<16x1xf32> to vector<16x128xf32>
      %39 = arith.mulf %31, %38 : vector<16x128xf32>
      %c0_19 = arith.constant 0 : index
      %c0_20 = arith.constant 0 : index
      %c0_21 = arith.constant 0 : index
      %40 = vector.load %arg6[%c0_19, %c0_20, %c0_21] : memref<1x16x128xf32, #tpu.memory_space<vmem>>, vector<1x16x128xf32>
      %41 = vector.shape_cast %40 : vector<1x16x128xf32> to vector<16x128xf32>
      %42 = vector.shape_cast %39 : vector<16x128xf32> to vector<1x16x128xf32>
      tpu.vector_store %arg6[%c0_19, %c0_20, %c0_21], %42 {strides = array<i32>} : memref<1x16x128xf32, #tpu.memory_space<vmem>>, vector<1x16x128xf32>,
    } else {
    }
    return
  }
  func.func @transform_0(%arg0: i32, %arg1: i32, %arg2: i32) -> (i32, i32, i32) {
    %c0_i32 = arith.constant 0 : i32
    return %arg0, %arg1, %arg2 : i32, i32, i32
  }
  func.func @transform_1(%arg0: i32, %arg1: i32, %arg2: i32) -> (i32, i32, i32) {
    %c0_i32 = arith.constant 0 : i32
    %c0_i32_0 = arith.constant 0 : i32
    return %arg0, %arg2, %c0_i32 : i32, i32, i32
  }
  func.func @transform_2(%arg0: i32, %arg1: i32, %arg2: i32) -> (i32, i32) {
    %c0_i32 = arith.constant 0 : i32
    %c0_i32_0 = arith.constant 0 : i32
    %c0_i32_1 = arith.constant 0 : i32
    return %c0_i32, %c0_i32_0 : i32, i32
  }
  func.func @transform_3(%arg0: i32, %arg1: i32, %arg2: i32) -> (i32, i32, i32) {
    %c0_i32 = arith.constant 0 : i32
    %c0_i32_0 = arith.constant 0 : i32
    return %arg0, %arg1, %c0_i32 : i32, i32, i32
  }
}

</mosaic_0001>

<llo_original>
// kernel: tpu_custom_call.1
$region0: #{tpu_custom_call.1}
  #allocation0 [shape = 'u32[]', space=smem, size = 0x4, offset = 0x4, fixed_abs, tag = 'smem constant byte address 0x4 - core index']
  #allocation1 [shape = 'u32[144,128]{1,0:T(1,128)}', space=vmem, size = 0x12000, scoped, tag = 'internal scratch']
  #allocation2 [shape = 'f32[16,128]{1,0:T(8,128)}', space=vmem, size = 0x2000, scoped, tag = 'scratch operand']
  %s0 = inlined_call_operand.hbm [shape: f32[2,16,16], index: 0, kind: input, shape index: {}]
  %s1 = inlined_call_operand.hbm [shape: bf16[2,16,128], index: 1, kind: input, shape index: {}]
  %s2 = inlined_call_operand.vmem [shape: f32[1,128], index: 2, kind: input, shape index: {}]
  %s3 = inlined_call_operand.hbm [shape: f32[2,16,128], index: 3, kind: output, shape index: {}]
  %s4 = sld [smem:[#allocation0]]
  $region61: #{tpu_custom_call.1} parent=0
    _
  %s6 = ssub.s32 1, %s4
  %s7 = scalar_select 0, %s6, %s4
  $region1: #{tpu_custom_call.1} parent=0
    #allocation3 [shape = 'u8[16384]{0}', space=vmem, size = 0x4000, scoped, tag = 'input window, operand 0']
    #allocation4 [shape = 's32[2]{0}', space=sflag, size = 0x8, scoped, tag = 'scoped memory for tpu_custom_call.1']
    #allocation5 [shape = 's32[2]{0}', space=sflag, size = 0x8, scoped, tag = 'scoped memory for tpu_custom_call.1']
    #allocation6 [shape = 'u8[8192]{0}', space=vmem, size = 0x2000, scoped, tag = 'input window, operand 1']
    #allocation7 [shape = 's32[2]{0}', space=sflag, size = 0x8, scoped, tag = 'scoped memory for tpu_custom_call.1']
    #allocation8 [shape = 'u8[16384]{0}', space=vmem, size = 0x4000, scoped, tag = 'output window, operand 0']
    %8 = vsyncpa [#allocation4], 0
    %s9 = scalar_lea.sflag [#allocation4], 1
    %10 = vsyncpa %s9, 0
    %11 = vsyncpa [#allocation7], 0
    %s12 = scalar_lea.sflag [#allocation7], 1
    %13 = vsyncpa %s12, 0
    %14 = vsyncpa [#allocation5], 0
    %s15 = scalar_lea.sflag [#allocation5], 1
    %16 = vsyncpa %s15, 0
    loop: start=0, step=1, limit=4
    $region2: #{tpu_custom_call.1} parent=1 // loop_pre_header
      _
    $region3: #{tpu_custom_call.1} parent=1 // loop_header
      %s18 = sphi 0, %s22
      %p19 = scmp.ge.s32.totalorder %s18, 4
      %s25 = sphi 0, %s44
      %s26 = sphi 0, %s40
      %s27 = sphi 0, %s36
      %s28 = sphi 0, %s25
      %s29 = sphi 0, %s26
      %s30 = sphi 0, %s27
      %s31 = sphi 0, %s28
      %s32 = sphi 0, %s29
      %s33 = sphi 0, %s30
      %s51 = sphi 0, %s53
      %s54 = sphi 0, %s51
      %s55 = sphi 0, %s54
      %s71 = sphi 0, %s55
      %s79 = sphi 0, %s81
      %s82 = sphi 0, %s79
      %s83 = sphi 0, %s82
      %s99 = sphi 0, %s83
      %s103 = sphi 0, %s103
      %s105 = sphi 0, %s103
      %s106 = sphi 0, %s105
      %s120 = sphi 0, %s106
      %s128 = sphi 0, %s130
      %s131 = sphi 0, %s128
      %s132 = sphi 0, %s131
      %s148 = sphi 0, %s132
    $region4: #{tpu_custom_call.1} parent=1 // loop_header_branch
      %21 = sbr.rel (%p19) target = $region8
    $region5: #{tpu_custom_call.1} parent=1 // loop_body
      %s23 = ssub.s32 %s18, 1
      %s24 = ssub.s32 %s18, 2
      %s34 = sadd.s32 1, %s27
      %p35 = scmp.ge.s32.totalorder %s34, 1
      %s36 = scalar_select %p35, 0, %s34
      %s37 = sadd.s32 1, %s26
      %s38 = scalar_select %p35, %s37, %s26
      %p39 = scmp.ge.s32.totalorder %s38, 1
      %s40 = scalar_select %p39, 0, %s38
      %s41 = sadd.s32 1, %s25
      %s42 = scalar_select %p39, %s41, %s25
      %p43 = scmp.ge.s32.totalorder %s42, 2
      %s44 = scalar_select %p43, 0, %s42
      %s45 = ssub.s32 %s25, %s44
      %s46 = ssub.s32 %s26, %s40
      %s47 = sor.u32 %s45, %s46
      %s48 = ssub.s32 %s27, %s36
      %s49 = sor.u32 %s47, %s48
      %p50 = scmp.eq.s32.totalorder %s49, 0
      %s52 = sadd.s32 %s51, 1
      %s53 = scalar_select %p50, %s51, %s52
      %p56 = pneg %p50
      %p57 = scmp.eq.s32.totalorder %s18, 1
      %p58 = por %p56, %p57
      %p59 = scmp.ne.s32.totalorder %s51, %s54
      %p60 = scmp.eq.s32.totalorder %s18, 0
      %p61 = por %p59, %p60
      %p62 = scmp.ne.s32.totalorder %s51, %s54
      %p63 = scmp.eq.s32.totalorder %s23, 1
      %p64 = por %p62, %p63
      %p65 = scmp.ne.s32.totalorder %s54, %s55
      %p66 = scmp.eq.s32.totalorder %s23, 0
      %p67 = por %p65, %p66
      %p68 = scmp.ne.s32.totalorder %s54, %s55
      %p69 = scmp.eq.s32.totalorder %s24, 1
      %p70 = por %p68, %p69
      %p72 = scmp.ne.s32.totalorder %s55, %s71
      %p73 = scmp.eq.s32.totalorder %s24, 0
      %p74 = por %p72, %p73
      %s75 = ssub.s32 %s25, %s44
      %s76 = ssub.s32 %s27, %s36
      %s77 = sor.u32 %s75, %s76
      %p78 = scmp.eq.s32.totalorder %s77, 0
      %s80 = sadd.s32 %s79, 1
      %s81 = scalar_select %p78, %s79, %s80
      %p84 = pneg %p78
      %p85 = scmp.eq.s32.totalorder %s18, 1
      %p86 = por %p84, %p85
      %p87 = scmp.ne.s32.totalorder %s79, %s82
      %p88 = scmp.eq.s32.totalorder %s18, 0
      %p89 = por %p87, %p88
      %p90 = scmp.ne.s32.totalorder %s79, %s82
      %p91 = scmp.eq.s32.totalorder %s23, 1
      %p92 = por %p90, %p91
      %p93 = scmp.ne.s32.totalorder %s82, %s83
      %p94 = scmp.eq.s32.totalorder %s23, 0
      %p95 = por %p93, %p94
      %p96 = scmp.ne.s32.totalorder %s82, %s83
      %p97 = scmp.eq.s32.totalorder %s24, 1
      %p98 = por %p96, %p97
      %p100 = scmp.ne.s32.totalorder %s83, %s99
      %p101 = scmp.eq.s32.totalorder %s24, 0
      %p102 = por %p100, %p101
      %s104 = sadd.s32 %s103, 1
      %p107 = scmp.eq.s32.totalorder %s18, 1
      %p108 = scmp.ne.s32.totalorder %s103, %s105
      %p109 = scmp.eq.s32.totalorder %s18, 0
      %p110 = por %p108, %p109
      %p111 = scmp.ne.s32.totalorder %s103, %s105
      %p112 = scmp.eq.s32.totalorder %s23, 1
      %p113 = por %p111, %p112
      %p114 = scmp.ne.s32.totalorder %s105, %s106
      %p115 = scmp.eq.s32.totalorder %s23, 0
      %p116 = por %p114, %p115
      %p117 = scmp.ne.s32.totalorder %s105, %s106
      %p118 = scmp.eq.s32.totalorder %s24, 1
      %p119 = por %p117, %p118
      %p121 = scmp.ne.s32.totalorder %s106, %s120
      %p122 = scmp.eq.s32.totalorder %s24, 0
      %p123 = por %p121, %p122
      %s124 = ssub.s32 %s25, %s44
      %s125 = ssub.s32 %s26, %s40
      %s126 = sor.u32 %s124, %s125
      %p127 = scmp.eq.s32.totalorder %s126, 0
      %s129 = sadd.s32 %s128, 1
      %s130 = scalar_select %p127, %s128, %s129
      %p133 = pneg %p127
      %p134 = scmp.eq.s32.totalorder %s18, 1
      %p135 = por %p133, %p134
      %p136 = scmp.ne.s32.totalorder %s128, %s131
      %p137 = scmp.eq.s32.totalorder %s18, 0
      %p138 = por %p136, %p137
      %p139 = scmp.ne.s32.totalorder %s128, %s131
      %p140 = scmp.eq.s32.totalorder %s23, 1
      %p141 = por %p139, %p140
      %p142 = scmp.ne.s32.totalorder %s131, %s132
      %p143 = scmp.eq.s32.totalorder %s23, 0
      %p144 = por %p142, %p143
      %p145 = scmp.ne.s32.totalorder %s131, %s132
      %p146 = scmp.eq.s32.totalorder %s24, 1
      %p147 = por %p145, %p146
      %p149 = scmp.ne.s32.totalorder %s132, %s148
      %p150 = scmp.eq.s32.totalorder %s24, 0
      %p151 = por %p149, %p150
      %p152 = scmp.le.s32.totalorder 1, %s18
      %p153 = scmp.lt.s32.totalorder %s18, 3
      %p154 = pnand %p152, %p153
      %p155 = pneg %p154
      // Predicated region
      $region9: #{tpu_custom_call.1} parent=5 // pred_check
        _
      $region10: #{tpu_custom_call.1} parent=5 // pred_check_branch
        %157 = sbr.rel (%p154) target = $region12
      $region11: #{tpu_custom_call.1} parent=5 // pred_region
        %s158 = ssub.s32 %s18, 1
        // Predicated region
        $region13: #{tpu_custom_call.1} parent=11 // pred_check
          %p159 = pneg %p116
        $region14: #{tpu_custom_call.1} parent=11 // pred_check_branch
          %161 = sbr.rel (%p159) target = $region16
        $region15: #{tpu_custom_call.1} parent=11 // pred_region
          _
        $region16: #{tpu_custom_call.1} parent=11 // pred_fallthru
          _
      $region12: #{tpu_custom_call.1} parent=5 // pred_fallthru
        _
      %p162 = scmp.lt.s32.totalorder %s18, 2
      // Predicated region
      $region17: #{tpu_custom_call.1} parent=5 // pred_check
        %p163 = pneg %p162
      $region18: #{tpu_custom_call.1} parent=5 // pred_check_branch
        %165 = sbr.rel (%p163) target = $region20
      $region19: #{tpu_custom_call.1} parent=5 // pred_region
        // Predicated region
        $region21: #{tpu_custom_call.1} parent=19 // pred_check
          %p166 = pneg %p61
        $region22: #{tpu_custom_call.1} parent=19 // pred_check_branch
          %168 = sbr.rel (%p166) target = $region24
        $region23: #{tpu_custom_call.1} parent=19 // pred_region
          %s169 = sand.u32 %s51, 1
          %s170 = scalar_lea.sflag [#allocation4], %s169
          %s171 = sand.u32 %s51, 1
          %s172 = smul.addr %s171, 16
          %s173 = scalar_lea.vmem [#allocation3], %s172
          %s174 = smul.u32 2, %s26
          %s176 = ssub.s32 256, 256
          %177 = vsyncadd %s170, %s176
          %s178 = sadd.s32 %s27, %s174
          %s179 = smul.addr %s25, 2
          %s180 = sadd.s32 %s178, %s179
          %s181 = smul.addr %s180, 128
          %s182 = scalar_lea.hbm %s0, %s181
          %s183 = sshll.u32 %s173, 4
          %s184 = int_to_ptr.vmem [resolvable:$true] %s183
          %189 = dma.hbm_to_vmem [thread:$0]  %s182, 256, %s184, %s170, 128, 128, 8
        $region24: #{tpu_custom_call.1} parent=19 // pred_fallthru
          _
        // Predicated region
        $region25: #{tpu_custom_call.1} parent=19 // pred_check
          %p190 = pneg %p89
        $region26: #{tpu_custom_call.1} parent=19 // pred_check_branch
          %192 = sbr.rel (%p190) target = $region28
        $region27: #{tpu_custom_call.1} parent=19 // pred_region
          %s193 = sand.u32 %s79, 1
          %s194 = scalar_lea.sflag [#allocation7], %s193
          %s195 = sand.u32 %s79, 1
          %s196 = smul.addr %s195, 8
          %s197 = scalar_lea.vmem [#allocation6], %s196
          %s198 = smul.u32 2, %s27
          %s200 = ssub.s32 128, 128
          %201 = vsyncadd %s194, %s200
          %s202 = smul.addr %s25, 2
          %s203 = sadd.s32 %s198, %s202
          %s204 = smul.addr %s203, 64
          %s205 = scalar_lea.hbm %s1, %s204
          %s206 = sshll.u32 %s197, 4
          %s207 = int_to_ptr.vmem [resolvable:$true] %s206
          %212 = dma.hbm_to_vmem [thread:$0]  %s205, 128, %s207, %s194, 64, 64, 4
        $region28: #{tpu_custom_call.1} parent=19 // pred_fallthru
          _
      $region20: #{tpu_custom_call.1} parent=5 // pred_fallthru
        _
      %p213 = scmp.le.s32.totalorder 1, %s18
      %p214 = scmp.lt.s32.totalorder %s18, 3
      %p215 = pnand %p213, %p214
      %p216 = pneg %p215
      // Predicated region
      $region29: #{tpu_custom_call.1} parent=5 // pred_check
        _
      $region30: #{tpu_custom_call.1} parent=5 // pred_check_branch
        %218 = sbr.rel (%p215) target = $region32
      $region31: #{tpu_custom_call.1} parent=5 // pred_region
        %s219 = ssub.s32 %s18, 1
        %s220 = sand.u32 %s54, 1
        %s221 = scalar_lea.sflag [#allocation4], %s220
        %s222 = sand.u32 %s54, 1
        %s223 = smul.addr %s222, 16
        %s224 = scalar_lea.vmem [#allocation3], %s223
        // Predicated region
        $region33: #{tpu_custom_call.1} parent=31 // pred_check
          %p225 = pneg %p67
        $region34: #{tpu_custom_call.1} parent=31 // pred_check_branch
          %227 = sbr.rel (%p225) target = $region36
        $region35: #{tpu_custom_call.1} parent=31 // pred_region
          %228 = dma.done %s221, 256
        $region36: #{tpu_custom_call.1} parent=31 // pred_fallthru
          _
        %s229 = sand.u32 %s82, 1
        %s230 = scalar_lea.sflag [#allocation7], %s229
        %s231 = sand.u32 %s82, 1
        %s232 = smul.addr %s231, 8
        %s233 = scalar_lea.vmem [#allocation6], %s232
        // Predicated region
        $region37: #{tpu_custom_call.1} parent=31 // pred_check
          %p234 = pneg %p95
        $region38: #{tpu_custom_call.1} parent=31 // pred_check_branch
          %236 = sbr.rel (%p234) target = $region40
        $region39: #{tpu_custom_call.1} parent=31 // pred_region
          %237 = dma.done %s230, 128
        $region40: #{tpu_custom_call.1} parent=31 // pred_fallthru
          _
        %s238 = sand.u32 %s54, 1
        %s239 = scalar_lea.sflag [#allocation4], %s238
        %s240 = sand.u32 %s54, 1
        %s241 = smul.addr %s240, 16
        %s242 = scalar_lea.vmem [#allocation3], %s241
        %p243 = pneg %p67
        %p244 = pneg %p64
        %s245 = sand.u32 %s82, 1
        %s246 = scalar_lea.sflag [#allocation7], %s245
        %s247 = sand.u32 %s82, 1
        %s248 = smul.addr %s247, 8
        %s249 = scalar_lea.vmem [#allocation6], %s248
        %p250 = pneg %p95
        %p251 = pneg %p92
        %p252 = pneg %p116
        %p253 = pneg %p113
        %p254 = pneg %p144
        %p255 = pneg %p141
        %s256 = sand.u32 %s131, 1
        %s257 = scalar_lea.sflag [#allocation5], %s256
        %s258 = sand.u32 %s131, 1
        %s259 = smul.addr %s258, 16
        %s260 = scalar_lea.vmem [#allocation8], %s259
        %s261 = smul.u32 2, %s29
        %s262 = smul.u32 2, %s30
        %s263 = smul.u32 2, %s29
        %p265 = scmp.eq.s32.totalorder %s30, 0
        // Predicated region
        $region41: #{tpu_custom_call.1} parent=31 // pred_check
          %p266 = pneg %p265
        $region42: #{tpu_custom_call.1} parent=31 // pred_check_branch
          %268 = sbr.rel (%p266) target = $region44
        $region43: #{tpu_custom_call.1} parent=31 // pred_region
          %269 = vst [vmem:[#allocation2] sm:$0xff] 0.0
          %270 = vst [vmem:[#allocation2 + $0x8] sm:$0xff] 0.0
        $region44: #{tpu_custom_call.1} parent=31 // pred_fallthru
          _
        %v271 = vld [vmem:[%s224] sm:$0xff]
        %v272 = vld [vmem:[%s224 + $0x8] sm:$0xff]
        %v273 = vpack.c.bf16 %v272, %v271
        %v274 = vlaneseq
        %v275 = vshrl.u32 %v274, 7
        %v276 = vadd.s32 %v275, 8
        %s277 = smul.u32 %s29, 16
        %v278 = vstv %s277
        %v279 = vadd.s32 %v275, %v278
        %v280 = vadd.s32 %v276, %v278
        %v281 = vlaneseq
        %v282 = vand.u32 %v281, 127
        %s283 = smul.u32 %s30, 16
        %v284 = vstv %s283
        %v285 = vadd.s32 %v282, %v284
        %vm286 = vcmp.eq.s32.totalorder %v279, %v285
        %vm287 = vcmp.eq.s32.totalorder %v280, %v285
        %v288 = vsel %vm286, 1, 0
        %v289 = vsel %vm287, 1, 0
        %v290 = vcvt.s32.f32 %v288
        %v291 = vcvt.s32.f32 %v289
        %v292 = vpack.c.bf16 %v291, %v290
        %v293 = vadd.bf16 %v273, %v292
        %v294 = vld [vmem:[#allocation2] sm:$0xff]
        %v295 = vld [vmem:[#allocation2 + $0x8] sm:$0xff]
        %v296 = vld [vmem:[%s233] sm:$0xf]
        %v297 = vld [vmem:[%s233 + $0x4] sm:$0xf]
        %v300 = vunpack.c.l.b16 %v296
        %v301 = vunpack.c.l.b16 %v297
        %v302 = vpack.c.b16 %v301, %v300
        %vm304 = vcmask 130048
        %v306 = vsel %vm304, %v293, 0
        %308 = vmatprep.subr.bf16.mxu0 0
        %309 = vmatpush1.bf16.msra.mxu0 0
        %310 = vmatprep.subr.bf16.mxu0 0
        %311 = vmatpush1.bf16.msra.mxu0 0
        %312 = vmatprep.subr.bf16.mxu0 0
        %313 = vmatpush1.bf16.msra.mxu0 0
        %314 = vmatprep.subr.bf16.mxu0 0
        %315 = vmatpush1.bf16.msra.mxu0 0
        %316 = vmatprep.subr.bf16.mxu0 0
        %317 = vmatpush1.bf16.msra.mxu0 0
        %318 = vmatprep.subr.bf16.mxu0 0
        %319 = vmatpush1.bf16.msra.mxu0 0
        %320 = vmatprep.subr.bf16.mxu0 0
        %321 = vmatpush1.bf16.msra.mxu0 0
        %322 = vmatprep.subr.bf16.mxu0 0
        %323 = vmatpush1.bf16.msra.mxu0 %v302
        %324 = vmatprep.subr.bf16.mxu0 0
        %325 = vmatpush2.bf16.msra.mxu0 0
        %326 = vmatprep.subr.bf16.mxu0 0
        %327 = vmatpush2.bf16.msra.mxu0 0
        %328 = vmatprep.subr.bf16.mxu0 0
        %329 = vmatpush2.bf16.msra.mxu0 0
        %330 = vmatprep.subr.bf16.mxu0 0
        %331 = vmatpush2.bf16.msra.mxu0 0
        %332 = vmatprep.subr.bf16.mxu0 0
        %333 = vmatpush2.bf16.msra.mxu0 0
        %334 = vmatprep.subr.bf16.mxu0 0
        %335 = vmatpush2.bf16.msra.mxu0 0
        %336 = vmatprep.subr.bf16.mxu0 0
        %337 = vmatpush2.bf16.msra.mxu0 0
        %338 = vmatprep.subr.bf16.mxu0 0
        %339 = vmatpush2.bf16.msra.mxu0 0
        %340 = vmatprep.mubr.bf16.mxu0 0
        %341 = vmatmul.mubr.bf16.gmra.mxu0 %v306
        %v342 = vpop.f32.mrf.mxu0
        %v343 = vadd.f32 0.0, %v342
        %v344 = vpop.f32.mrf.mxu0
        %v345 = vpop.f32.mrf.mxu0
        %v346 = vadd.f32 0.0, %v345
        %v347 = vpop.f32.mrf.mxu0
        %348 = vdwg.mxu0
        %v349 = vadd.f32 %v294, %v343
        %v350 = vadd.f32 %v295, %v346
        %351 = vst [vmem:[#allocation2] sm:$0xff] %v349
        %352 = vst [vmem:[#allocation2 + $0x8] sm:$0xff] %v350
        // Predicated region
        $region45: #{tpu_custom_call.1} parent=31 // pred_check
          %p353 = pneg %p265
        $region46: #{tpu_custom_call.1} parent=31 // pred_check_branch
          %355 = sbr.rel (%p353) target = $region48
        $region47: #{tpu_custom_call.1} parent=31 // pred_region
          %v356 = vld [vmem:[#allocation2] sm:$0xff]
          %v357 = vld [vmem:[#allocation2 + $0x8] sm:$0xff]
          %v358 = vld [vmem:[%s2] sm:$0x1]
          %v360 = vlaneseq
          %v361 = vshrl.u32 %v360, 7
          %v362 = vsub.s32 0, %v361
          %v363 = vrot.slane %v358, %v362
          %v365 = vadd.f32 %v356, %v363
          %v366 = vadd.f32 %v357, %v363
          %v367 = vmul.f32 %v365, %v365
          %v368 = vmul.f32 %v366, %v366
          %369 = vadd.xlane.f32.xlu0 %v367
          %v370 = vpop.xlane.xlu0 %369
          %371 = vadd.xlane.f32.xlu0 %v368
          %v372 = vpop.xlane.xlu0 %371
          %v373 = vmax.f32 %v370, 1e-24
          %v374 = vmax.f32 %v372, 1e-24
          %v375 = vrsqrt.pop %v373
          %v376 = vrsqrt.pop %v374
          %v377 = vmul.f32 %v365, %v375
          %v378 = vmul.f32 %v366, %v376
          %379 = vst [vmem:[%s260] sm:$0xff] %v377
          %380 = vst [vmem:[%s260 + $0x8] sm:$0xff] %v378
        $region48: #{tpu_custom_call.1} parent=31 // pred_fallthru
          _
        %s381 = sand.u32 %s131, 1
        %s382 = scalar_lea.sflag [#allocation5], %s381
        %s383 = sand.u32 %s131, 1
        %s384 = smul.addr %s383, 16
        %s385 = scalar_lea.vmem [#allocation8], %s384
        // Predicated region
        $region49: #{tpu_custom_call.1} parent=31 // pred_check
          %p386 = pneg %p141
        $region50: #{tpu_custom_call.1} parent=31 // pred_check_branch
          %388 = sbr.rel (%p386) target = $region52
        $region51: #{tpu_custom_call.1} parent=31 // pred_region
          %s389 = smul.u32 2, %s29
          %s391 = ssub.s32 256, 256
          %392 = vsyncadd %s382, %s391
          %s393 = smul.addr %s28, 2
          %s394 = sadd.s32 %s389, %s393
          %s395 = smul.addr %s394, 128
          %s396 = scalar_lea.hbm %s3, %s395
          %s397 = sshll.u32 %s385, 4
          %s398 = int_to_ptr.vmem [resolvable:$true] %s397
          %403 = dma.vmem_to_hbm [thread:$0]  %s398, 256, %s396, %s382, 128, 128, 8
        $region52: #{tpu_custom_call.1} parent=31 // pred_fallthru
          _
      $region32: #{tpu_custom_call.1} parent=5 // pred_fallthru
        _
      %p404 = scmp.le.s32.totalorder 2, %s18
      // Predicated region
      $region53: #{tpu_custom_call.1} parent=5 // pred_check
        %p405 = pneg %p404
      $region54: #{tpu_custom_call.1} parent=5 // pred_check_branch
        %407 = sbr.rel (%p405) target = $region56
      $region55: #{tpu_custom_call.1} parent=5 // pred_region
        %s408 = ssub.s32 %s18, 2
        // Predicated region
        $region57: #{tpu_custom_call.1} parent=55 // pred_check
          %p409 = pneg %p147
        $region58: #{tpu_custom_call.1} parent=55 // pred_check_branch
          %411 = sbr.rel (%p409) target = $region60
        $region59: #{tpu_custom_call.1} parent=55 // pred_region
          %s412 = sand.u32 %s132, 1
          %s413 = scalar_lea.sflag [#allocation5], %s412
          %s414 = sand.u32 %s132, 1
          %s415 = smul.addr %s414, 16
          %s416 = scalar_lea.vmem [#allocation8], %s415
          %417 = dma.done %s413, 256
        $region60: #{tpu_custom_call.1} parent=55 // pred_fallthru
          _
      $region56: #{tpu_custom_call.1} parent=5 // pred_fallthru
        _
    $region6: #{tpu_custom_call.1} parent=1 // loop_footer
      %s22 = sadd.s32 1, %s18
    $region7: #{tpu_custom_call.1} parent=1 // loop_footer_branch
      %17 = sbr.rel target = $region3
    $region8: #{tpu_custom_call.1} parent=1 // loop_exit
      _
    %418 = vsyncpa [#allocation4], 1
    %s419 = scalar_lea.sflag [#allocation4], 1
    %420 = vsyncpa %s419, 1
    %421 = vsyncpa [#allocation7], 1
    %s422 = scalar_lea.sflag [#allocation7], 1
    %423 = vsyncpa %s422, 1
    %424 = vsyncpa [#allocation5], 1
    %s425 = scalar_lea.sflag [#allocation5], 1
    %426 = vsyncpa %s425, 1

</llo_original>
